<compile_context>
chip_gen: v7x
topology: tpu7x:2x2x1
jax: 0.10.0
libtpu: 0.0.40
codegen_flags: <defaults>
</compile_context>

<pallas_src>
import jax
import jax.numpy as jnp
from jax.experimental import pallas as pl
from jax.experimental.pallas import tpu as pltpu


# ----------------------------------------------------------------------------
# Kernel body: whole-tile VMEM pass-through.
# ----------------------------------------------------------------------------
def _identity_kernel(x_ref, o_ref):
    o_ref[...] = x_ref[...]


def _min_sublane(dtype) -> int:
    """Minimum sublane multiple for the dtype's packing (f32:8, bf16:16, i8:32)."""
    itemsize = jnp.dtype(dtype).itemsize
    return {4: 8, 2: 16, 1: 32}.get(itemsize, 8)


def _pallas_identity_2d(x: jax.Array) -> jax.Array:
    """Identity over a 2-D array, tuned for HBM-bandwidth-bound copies."""
    m, n = x.shape
    itemsize = jnp.dtype(x.dtype).itemsize
    total_bytes = m * n * itemsize

    # ---- Small-array fast path: one whole-array block, no grid. -------------
    # 8 MiB per buffer (in + out = 16 MiB live) fits comfortably inside the
    # scoped-VMEM default on v5e/v6e/v7x.
    if total_bytes <= 8 * 1024 * 1024:
        return pl.pallas_call(
            _identity_kernel,
            out_shape=jax.ShapeDtypeStruct((m, n), x.dtype),
            in_specs=[pl.BlockSpec(memory_space=pltpu.MemorySpace.VMEM)],
            out_specs=pl.BlockSpec(memory_space=pltpu.MemorySpace.VMEM),
        )(x)

    # ---- Large-array path: big lane-dense tiles, cdiv grid. -----------------
    sub = _min_sublane(x.dtype)
    lane = 128

    # Lane (last) dim: take the full extent when modest, otherwise a large
    # 128-multiple tile (ragged edge handled by Pallas masking).
    tile_n = n if n <= 2048 else 2048

    # Sublane dim: size the tile so that double-buffered input + output
    # (4 live tiles) stays under ~16 MiB -> <= 4 MiB per tile.  This is safe
    # on v5e's 16 MiB scoped default and v7x's 64 MiB physical VMEM while
    # still amortizing the ~0.35 us per-grid-step overhead.
    tile_bytes_budget = 4 * 1024 * 1024
    rows = max(sub, tile_bytes_budget // max(1, tile_n * itemsize))
    tile_m = (min(rows, m) // sub) * sub
    tile_m = max(sub, tile_m)
    if tile_m > m:
        tile_m = m

    grid = (pl.cdiv(m, tile_m), pl.cdiv(n, tile_n))
    return pl.pallas_call(
        _identity_kernel,
        out_shape=jax.ShapeDtypeStruct((m, n), x.dtype),
        grid_spec=pltpu.PrefetchScalarGridSpec(
            num_scalar_prefetch=0,
            grid=grid,
            in_specs=[pl.BlockSpec((tile_m, tile_n), lambda i, j: (i, j))],
            out_specs=pl.BlockSpec((tile_m, tile_n), lambda i, j: (i, j)),
        ),
        compiler_params=pltpu.CompilerParams(
            # Both axes independent -> lets v7x shard the grid across its
            # 2 TensorCores; a no-op (but harmless) on v5e/v6e.
            dimension_semantics=("parallel", "parallel"),
            vmem_limit_bytes=32 * 1024 * 1024,
        ),
    )(x)


def pallas_identity(x: jax.Array) -> jax.Array:
    """Identity over an arbitrary-rank array via a lane-dense 2-D view."""
    total = x.size
    if total % 128 == 0:
        x2 = x.reshape(total // 128, 128)   # lane-dense: last dim = 128
    else:
        x2 = x.reshape(1, total)
    y2 = _pallas_identity_2d(x2)
    return y2.reshape(x.shape)


# ----------------------------------------------------------------------------
# Faithful port of the (empty) PyTorch module's forward.
# ----------------------------------------------------------------------------
class CNN:
    """JAX port of the empty PyTorch CNN module."""

    def __init__(self):
        # The PyTorch __init__ registers no parameters; nothing to initialize.
        pass

    def forward(self):
        # PyTorch forward body is `pass` -> returns None.  Match exactly.
        return None


if __name__ == "__main__":
    # Deterministic small example input (only exercises the Pallas plumbing,
    # since the module's forward consumes no tensors).
    key = jax.random.PRNGKey(0)
    x = jax.random.normal(key, (2, 4, 16, 16), dtype=jnp.float32)

    # 1) Run the demonstration Pallas kernel and verify it round-trips.
    y = pallas_identity(x)
    jax.block_until_ready(y)
    assert y.shape == x.shape and y.dtype == x.dtype
    assert bool(jnp.all(y == x))

    # 2) Run the faithful (empty) forward.
    model = CNN()
    out = model.forward()
    assert out is None  # matches PyTorch semantics exactly

    print("KERNEL_OK")
</pallas_src>

<mosaic_0001>
module attributes {stable_mosaic.version = 11 : i64} {
  func.func @_identity_kernel(%arg0: memref<16x128xf32, #tpu.memory_space<vmem>>, %arg1: memref<16x128xf32, #tpu.memory_space<vmem>>) attributes {dimension_semantics = [], scalar_prefetch = 0 : i64, scratch_operands = 0 : i64, tpu.core_type = #tpu.core_type<tc>} {
    %c0 = arith.constant 0 : index
    %c0_0 = arith.constant 0 : index
    %0 = vector.load %arg0[%c0, %c0_0] : memref<16x128xf32, #tpu.memory_space<vmem>>, vector<16x128xf32>
    %c0_1 = arith.constant 0 : index
    %c0_2 = arith.constant 0 : index
    %1 = vector.load %arg1[%c0_1, %c0_2] : memref<16x128xf32, #tpu.memory_space<vmem>>, vector<16x128xf32>
    tpu.vector_store %arg1[%c0_1, %c0_2], %0 {strides = array<i32>} : memref<16x128xf32, #tpu.memory_space<vmem>>, vector<16x128xf32>,
    return
  }
}

</mosaic_0001>

<llo_original>
// kernel: tpu_custom_call.1
$region0: #{tpu_custom_call.1}
  #allocation0 [shape = 'u32[]', space=smem, size = 0x4, offset = 0x4, fixed_abs, tag = 'smem constant byte address 0x4 - core index']
  #allocation1 [shape = 'u32[144,128]{1,0:T(1,128)}', space=vmem, size = 0x12000, scoped, tag = 'internal scratch']
  %s0 = inlined_call_operand.hbm [shape: f32[16,128], index: 0, kind: input, shape index: {}]
  %s1 = inlined_call_operand.hbm [shape: f32[16,128], index: 1, kind: output, shape index: {}]
  %s2 = sld [smem:[#allocation0]]
  $region18: #{tpu_custom_call.1} parent=0
    _
  %s4 = ssub.s32 1, %s2
  %s5 = scalar_select 0, %s4, %s2
  $region1: #{tpu_custom_call.1} parent=0
    #allocation2 [shape = 'u8[8192]{0}', space=vmem, size = 0x2000, scoped, tag = 'input window, operand 0, single buffered']
    #allocation3 [shape = 's32[1]{0}', space=sflag, size = 0x4, scoped, tag = 'scoped memory for tpu_custom_call.1']
    #allocation4 [shape = 's32[1]{0}', space=sflag, size = 0x4, scoped, tag = 'scoped memory for tpu_custom_call.1']
    #allocation5 [shape = 'u8[8192]{0}', space=vmem, size = 0x2000, scoped, tag = 'output window, operand 0, single buffered']
    %6 = vsyncpa [#allocation3], 0
    %7 = vsyncpa [#allocation4], 0
    // Predicated region
    $region2: #{tpu_custom_call.1} parent=1 // pred_check
      _
    $region3: #{tpu_custom_call.1} parent=1 // pred_check_branch
      %9 = sbr.rel (0) target = $region5
    $region4: #{tpu_custom_call.1} parent=1 // pred_region
      %s11 = ssub.s32 256, 256
      %12 = vsyncadd [#allocation3], %s11
      %s13 = sshll.u32 [#allocation2], 4
      %s14 = int_to_ptr.vmem [resolvable:$true] %s13
      %19 = dma.hbm_to_vmem [thread:$0]  %s0, 256, %s14, [#allocation3], 128, 128, 8
    $region5: #{tpu_custom_call.1} parent=1 // pred_fallthru
      _
    // Predicated region
    $region6: #{tpu_custom_call.1} parent=1 // pred_check
      _
    $region7: #{tpu_custom_call.1} parent=1 // pred_check_branch
      %21 = sbr.rel (0) target = $region9
    $region8: #{tpu_custom_call.1} parent=1 // pred_region
      %22 = dma.done [#allocation3], 256
    $region9: #{tpu_custom_call.1} parent=1 // pred_fallthru
      _
    %v23 = vld [vmem:[#allocation2] sm:$0xff]
    %v24 = vld [vmem:[#allocation2 + $0x8] sm:$0xff]
    %25 = vst [vmem:[#allocation5] sm:$0xff] %v23
    %26 = vst [vmem:[#allocation5 + $0x8] sm:$0xff] %v24
    // Predicated region
    $region10: #{tpu_custom_call.1} parent=1 // pred_check
      _
    $region11: #{tpu_custom_call.1} parent=1 // pred_check_branch
      %28 = sbr.rel (0) target = $region13
    $region12: #{tpu_custom_call.1} parent=1 // pred_region
      %s30 = ssub.s32 256, 256
      %31 = vsyncadd [#allocation4], %s30
      %s32 = sshll.u32 [#allocation5], 4
      %s33 = int_to_ptr.vmem [resolvable:$true] %s32
      %38 = dma.vmem_to_hbm [thread:$0]  %s33, 256, %s1, [#allocation4], 128, 128, 8
    $region13: #{tpu_custom_call.1} parent=1 // pred_fallthru
      _
    // Predicated region
    $region14: #{tpu_custom_call.1} parent=1 // pred_check
      _
    $region15: #{tpu_custom_call.1} parent=1 // pred_check_branch
      %40 = sbr.rel (0) target = $region17
    $region16: #{tpu_custom_call.1} parent=1 // pred_region
      %41 = dma.done [#allocation4], 256
    $region17: #{tpu_custom_call.1} parent=1 // pred_fallthru
      _
    %42 = vsyncpa [#allocation3], 1
    %43 = vsyncpa [#allocation4], 1

</llo_original>
